<compile_context>
chip_gen: v5e
topology: v5e:2x2
jax: 0.10.0
libtpu: 0.0.40
codegen_flags: <defaults>
</compile_context>

<pallas_src>
import math

import jax
import jax.numpy as jnp
from jax.experimental import pallas as pl
from jax.experimental.pallas import tpu as pltpu

BN_EPS = 1e-5
_VMEM_LIMIT_BYTES = 32 * 1024 * 1024   # explicit; safe on v5e/v6e/v7x
_P1_BUDGET = 16 * 1024 * 1024          # phase-1 working set target
_P2_BUDGET = 20 * 1024 * 1024          # phase-2 working set target
_FUSED_BUDGET = 12 * 1024 * 1024       # resident footprint cap for fused path


def _round_up(a, m):
    return ((a + m - 1) // m) * m


# --------------------------------------------------------------------------
# Fused path: whole problem resident in VMEM, single grid step.
# --------------------------------------------------------------------------
def _make_fused_kernel(B, L, n_padded, eps):
    inv_n = 1.0 / float(n_padded)

    def kernel(x_ref, w_ref, g_ref, bt_ref, o_ref):
        cin = x_ref.shape[-1]
        x2 = x_ref[...].reshape(B * L, cin)          # leading-dim collapse
        y = jnp.dot(x2, w_ref[...], preferred_element_type=jnp.float32)
        cout = y.shape[-1]

        # Circular-pad token weights: the first/last token of every batch is
        # duplicated once by the pad -> weight 2 (weight 3 when L == 1).
        r = jax.lax.broadcasted_iota(jnp.int32, (B * L, 1), 0) % L
        wgt = (1.0 + (r == 0).astype(jnp.float32)
               + (r == L - 1).astype(jnp.float32))

        s = jnp.sum(y * wgt, axis=0, keepdims=True)          # (1, Cout)
        q = jnp.sum(y * y * wgt, axis=0, keepdims=True)
        mean = s * inv_n
        var = jnp.maximum(q * inv_n - mean * mean, 0.0)      # clamp >= 0
        a = g_ref[...] * jax.lax.rsqrt(var + eps)
        b = bt_ref[...] - mean * a

        z = (y * a + b).astype(o_ref.dtype)
        z3 = z.reshape(B, L, cout)
        o_ref[:, 1:L + 1, :] = z3                            # interior
        o_ref[:, 0:1, :] = z3[:, L - 1:L, :]                 # left pad row
        o_ref[:, L + 1:L + 2, :] = z3[:, 0:1, :]             # right pad row

    return kernel


# --------------------------------------------------------------------------
# Streaming path, phase 1: partial per-channel sum / sum-of-squares.
# --------------------------------------------------------------------------
def _make_stats_kernel(T, tile, nt, num_tiles, need_mask):
    def kernel(x_ref, w_ref, sum_ref, sq_ref):
        p = pl.program_id(0)
        t = pl.program_id(1)
        idx = p * nt + t                     # global tile index (< num_tiles)

        @pl.when(t == 0)
        def _init():
            sum_ref[...] = jnp.zeros_like(sum_ref)
            sq_ref[...] = jnp.zeros_like(sq_ref)

        # Pointwise conv == (tile, Cin) @ (Cin, Cout) on the MXU, f32 accum.
        y = jnp.dot(x_ref[...], w_ref[...], preferred_element_type=jnp.float32)

        if need_mask:
            # Only the final tile is partial; handle it with a STATIC slice
            # (no per-step iota/compare/select, no garbage-row pollution).
            last_valid = T - (num_tiles - 1) * tile

            @pl.when(idx < num_tiles - 1)
            def _bulk():
                sum_ref[0:1, :] += jnp.sum(y, axis=0, keepdims=True)
                sq_ref[0:1, :] += jnp.sum(y * y, axis=0, keepdims=True)

            @pl.when(idx == num_tiles - 1)
            def _edge():
                yv = y[:last_valid, :]
                sum_ref[0:1, :] += jnp.sum(yv, axis=0, keepdims=True)
                sq_ref[0:1, :] += jnp.sum(yv * yv, axis=0, keepdims=True)
        else:
            sum_ref[0:1, :] += jnp.sum(y, axis=0, keepdims=True)
            sq_ref[0:1, :] += jnp.sum(y * y, axis=0, keepdims=True)

    return kernel


# --------------------------------------------------------------------------
# Streaming path, phase 2: recompute the cheap conv, apply folded BN affine
# and write the circularly padded block.  ONE matmul per grid step.
# --------------------------------------------------------------------------
def _make_norm_kernel(bb, L):
    def kernel(x_ref, w_ref, a_ref, b_ref, o_ref):
        cin = x_ref.shape[-1]
        y = jnp.dot(x_ref[...].reshape(bb * L, cin), w_ref[...],
                    preferred_element_type=jnp.float32)
        z = (y * a_ref[...] + b_ref[...]).astype(o_ref.dtype)
        z3 = z.reshape(bb, L, z.shape[-1])
        o_ref[:, 1:L + 1, :] = z3                    # interior tokens
        o_ref[:, 0:1, :] = z3[:, L - 1:L, :]         # left circular pad
        o_ref[:, L + 1:L + 2, :] = z3[:, 0:1, :]     # right circular pad

    return kernel


@jax.jit
def embedding_encoder_conv(x, w, gamma, beta):
    """x: (B, L, Cin) f32, w: (Cin, Cout) (squeezed/transposed conv weight),
    gamma/beta: (Cout,)  ->  (B, L+2, Cout) f32."""
    B, L, Cin = x.shape
    Cout = w.shape[1]
    n_padded = B * (L + 2)

    x = x.astype(jnp.float32)
    w = w.astype(jnp.float32)
    g2 = gamma.reshape(1, Cout).astype(jnp.float32)
    bt2 = beta.reshape(1, Cout).astype(jnp.float32)

    in_rowp = _round_up(Cin, 128) * 4      # lane-padded f32 bytes / token row
    out_rowp = _round_up(Cout, 128) * 4

    # ------------------- small-problem fused path -------------------
    # (input, output and the conv/affine temporaries all resident in VMEM)
    fused_ok = (L % 8 == 0) or (B == 1)
    fused_bytes = (B * L * (in_rowp + 4 * out_rowp + 2048)
                   + B * (L + 2) * out_rowp)
    if fused_ok and fused_bytes <= _FUSED_BUDGET:
        return pl.pallas_call(
            _make_fused_kernel(B, L, n_padded, BN_EPS),
            out_shape=jax.ShapeDtypeStruct((B, L + 2, Cout), jnp.float32),
            grid=(1,),
            in_specs=[
                pl.BlockSpec((B, L, Cin), lambda i: (0, 0, 0)),
                pl.BlockSpec((Cin, Cout), lambda i: (0, 0)),
                pl.BlockSpec((1, Cout), lambda i: (0, 0)),
                pl.BlockSpec((1, Cout), lambda i: (0, 0)),
            ],
            out_specs=pl.BlockSpec((B, L + 2, Cout), lambda i: (0, 0, 0)),
            compiler_params=pltpu.CompilerParams(
                dimension_semantics=("arbitrary",),
                vmem_limit_bytes=_VMEM_LIMIT_BYTES),
        )(x, w, g2, bt2)

    # ------------------- phase 1: streaming BN stats -------------------
    T = B * L
    x2d = x.reshape(T, Cin)                 # metadata-only reshape in HBM

    # ~8192-row tiles at 32 channels (>= 4 MiB per step); scale down for wide
    # channels so the double-buffered input + two f32 temps fit the budget.
    tile = _P1_BUDGET // (2 * in_rowp + 2 * out_rowp)
    tile = _round_up(max(8, min(tile, 16384, T)), 8)
    num_tiles = -(-T // tile)

    # Two-way 'parallel' split (dual TensorCore on v7x) only when it divides
    # evenly, so no grid step ever points at a fully out-of-range block.
    if num_tiles >= 3 and num_tiles % 2 == 1:
        t2 = _round_up(max(8, -(-T // (num_tiles + 1))), 8)
        if (-(-T // t2)) % 2 == 0:
            tile = t2
            num_tiles = -(-T // tile)
    P = 2 if (num_tiles >= 2 and num_tiles % 2 == 0) else 1
    nt = num_tiles // P
    need_mask = (num_tiles * tile != T)

    psum, psq = pl.pallas_call(
        _make_stats_kernel(T, tile, nt, num_tiles, need_mask),
        out_shape=(jax.ShapeDtypeStruct((P * 8, Cout), jnp.float32),
                   jax.ShapeDtypeStruct((P * 8, Cout), jnp.float32)),
        grid=(P, nt),
        in_specs=[
            pl.BlockSpec((tile, Cin), lambda p, t: (p * nt + t, 0)),
            pl.BlockSpec((Cin, Cout), lambda p, t: (0, 0)),   # resident weight
        ],
        out_specs=(pl.BlockSpec((8, Cout), lambda p, t: (p, 0)),
                   pl.BlockSpec((8, Cout), lambda p, t: (p, 0))),
        compiler_params=pltpu.CompilerParams(
            dimension_semantics=("parallel", "arbitrary"),
            vmem_limit_bytes=_VMEM_LIMIT_BYTES),
    )(x2d, w)

    # --------- finalize (tiny XLA ops): boundary tokens + folded affine ----
    # First & last token of every batch are duplicated by the circular pad;
    # add their conv output once more so BN sees all B*(L+2) padded tokens.
    xb = jnp.concatenate([x[:, 0, :], x[:, L - 1, :]], axis=0)   # (2B, Cin)
    yb = jnp.dot(xb, w)                                          # (2B, Cout)
    s = jnp.sum(psum, axis=0, keepdims=True) + jnp.sum(yb, axis=0, keepdims=True)
    q = jnp.sum(psq, axis=0, keepdims=True) + jnp.sum(yb * yb, axis=0,
                                                      keepdims=True)
    mean = s / float(n_padded)
    var = jnp.maximum(q / float(n_padded) - mean * mean, 0.0)   # clamp >= 0
    a_scale = g2 * jax.lax.rsqrt(var + BN_EPS)                  # (1, Cout)
    b_shift = bt2 - mean * a_scale                              # (1, Cout)

    # ------------- phase 2: normalize + padded output write -------------
    per_row = 2 * in_rowp + 5 * out_rowp     # dbl-buffered in/out + f32 temps
    max_rows = max(L, min(16384, _P2_BUDGET // per_row))
    if L % 8 != 0 and B > 1:
        bb = 1   # leading-dim collapse only guaranteed layout-preserving for L%8==0
    else:
        divisors = [d for d in range(1, B + 1)
                    if B % d == 0 and d * L <= max_rows]
        bb = 1
        for min_steps in (4, 2, 1):          # prefer >=4 steps (v7x dual-TC)
            cands = [d for d in divisors if B // d >= min_steps]
            if cands:
                bb = max(cands)
                break

    out = pl.pallas_call(
        _make_norm_kernel(bb, L),
        out_shape=jax.ShapeDtypeStruct((B, L + 2, Cout), jnp.float32),
        grid=(B // bb,),
        in_specs=[
            pl.BlockSpec((bb, L, Cin), lambda i: (i, 0, 0)),
            pl.BlockSpec((Cin, Cout), lambda i: (0, 0)),
            pl.BlockSpec((1, Cout), lambda i: (0, 0)),
            pl.BlockSpec((1, Cout), lambda i: (0, 0)),
        ],
        out_specs=pl.BlockSpec((bb, L + 2, Cout), lambda i: (i, 0, 0)),
        compiler_params=pltpu.CompilerParams(
            dimension_semantics=("parallel",),
            vmem_limit_bytes=_VMEM_LIMIT_BYTES),
    )(x, w, a_scale, b_shift)
    return out


def reference(x, w, gamma, beta):
    xp = jnp.concatenate([x[:, -1:, :], x, x[:, :1, :]], axis=1)
    y = jnp.einsum("blc,cd->bld", xp, w)
    mean = jnp.mean(y, axis=(0, 1), keepdims=True)
    var = jnp.mean(jnp.square(y - mean), axis=(0, 1), keepdims=True)
    return gamma * (y - mean) * jax.lax.rsqrt(var + BN_EPS) + beta


if __name__ == "__main__":
    key = jax.random.PRNGKey(0)

    def run_case(B, L, in_dim, out_dim, atol, random_affine=False):
        kx, kw, kg, kb = jax.random.split(jax.random.fold_in(key, B * 131 + L), 4)
        x = jax.random.normal(kx, (B, L, in_dim), dtype=jnp.float32)

        # Deterministic kaiming_normal_(mode='fan_in', nonlinearity='leaky_relu'):
        # fan_in = in_dim * 1 * 1, gain = sqrt(2 / (1 + 0.01^2)).
        gain = math.sqrt(2.0 / (1.0 + 0.01 ** 2))
        std = gain / math.sqrt(in_dim)
        # PyTorch weight is (out_dim, in_dim, 1, 1); we store its squeezed
        # transpose (in_dim, out_dim) for the tokens @ weight matmul.
        w = std * jax.random.normal(kw, (in_dim, out_dim), dtype=jnp.float32)

        if random_affine:
            gamma = 1.0 + 0.1 * jax.random.normal(kg, (out_dim,), jnp.float32)
            beta = 0.1 * jax.random.normal(kb, (out_dim,), jnp.float32)
        else:
            gamma = jnp.ones((out_dim,), dtype=jnp.float32)
            beta = jnp.zeros((out_dim,), dtype=jnp.float32)

        out = jax.block_until_ready(embedding_encoder_conv(x, w, gamma, beta))
        ref = reference(x, w, gamma, beta)
        assert out.shape == (B, L + 2, out_dim), out.shape
        assert jnp.allclose(out, ref, atol=atol, rtol=atol), float(
            jnp.max(jnp.abs(out - ref)))

    # Spec-scale case (fused single-call path).
    run_case(2, 8, 32, 32, 2e-4)
    # Larger case exercising the streaming path: dual-core phase-1 stats,
    # wrapper finalize, and the batched phase-2 normalize/write.
    run_case(16, 1024, 32, 32, 1e-3, random_affine=True)

    print("KERNEL_OK")
</pallas_src>

<mosaic_0001>
module attributes {stable_mosaic.version = 11 : i64} {
  func.func @kernel(%arg0: i32, %arg1: memref<2x8x32xf32, #tpu.memory_space<vmem>>, %arg2: memref<32x32xf32, #tpu.memory_space<vmem>>, %arg3: memref<1x32xf32, #tpu.memory_space<vmem>>, %arg4: memref<1x32xf32, #tpu.memory_space<vmem>>, %arg5: memref<2x10x32xf32, #tpu.memory_space<vmem>>) attributes {dimension_semantics = [#tpu.dimension_semantics<arbitrary>], iteration_bounds = array<i64: 1>, scalar_prefetch = 0 : i64, scratch_operands = 0 : i64, tpu.core_type = #tpu.core_type<tc>, window_params = [{pipeline_mode = #tpu.pipeline_mode<synchronous>, transform_indices = @transform_0, window_bounds = array<i64: 2, 8, 32>}, {pipeline_mode = #tpu.pipeline_mode<synchronous>, transform_indices = @transform_1, window_bounds = array<i64: 32, 32>}, {pipeline_mode = #tpu.pipeline_mode<synchronous>, transform_indices = @transform_2, window_bounds = array<i64: 1, 32>}, {pipeline_mode = #tpu.pipeline_mode<synchronous>, transform_indices = @transform_3, window_bounds = array<i64: 1, 32>}, {pipeline_mode = #tpu.pipeline_mode<synchronous>, transform_indices = @transform_4, window_bounds = array<i64: 2, 10, 32>}]} {
    %c0 = arith.constant 0 : index
    %c0_0 = arith.constant 0 : index
    %c0_1 = arith.constant 0 : index
    %0 = vector.load %arg1[%c0, %c0_0, %c0_1] : memref<2x8x32xf32, #tpu.memory_space<vmem>>, vector<2x8x32xf32>
    %1 = vector.shape_cast %0 : vector<2x8x32xf32> to vector<16x32xf32>
    %c0_2 = arith.constant 0 : index
    %c0_3 = arith.constant 0 : index
    %2 = vector.load %arg2[%c0_2, %c0_3] : memref<32x32xf32, #tpu.memory_space<vmem>>, vector<32x32xf32>
    %cst = arith.constant dense<0.000000e+00> : vector<16x32xf32>
    %3 = tpu.matmul %1, %2, %cst {dimension_numbers = #tpu.dot_dimension_numbers<[1], [0], [0], [1], [0, 0, 1, 1], [], []>} : vector<16x32xf32>, vector<32x32xf32>, vector<16x32xf32> -> vector<16x32xf32>
    %4 = tpu.iota {dimensions = array<i32: 0>} : vector<16x1xi32>
    %c8_i32 = arith.constant 8 : i32
    %c0_i32 = arith.constant 0 : i32
    %5 = arith.cmpi eq, %c8_i32, %c0_i32 : i32
    %c1_i32 = arith.constant 1 : i32
    %6 = arith.select %5, %c1_i32, %c8_i32 : i32
    %7 = vector.broadcast %6 : i32 to vector<16x1xi32>
    %8 = arith.remsi %4, %7 : vector<16x1xi32>
    %c0_i32_4 = arith.constant 0 : i32
    %9 = vector.broadcast %c0_i32_4 : i32 to vector<16x1xi32>
    %10 = arith.cmpi ne, %8, %9 : vector<16x1xi32>
    %c0_i32_5 = arith.constant 0 : i32
    %11 = vector.broadcast %c0_i32_5 : i32 to vector<16x1xi32>
    %12 = arith.cmpi slt, %8, %11 : vector<16x1xi32>
    %c0_i32_6 = arith.constant 0 : i32
    %13 = arith.cmpi slt, %6, %c0_i32_6 : i32
    %14 = vector.broadcast %13 : i1 to vector<16x1xi1>
    %15 = vector.broadcast %14 : vector<16x1xi1> to vector<16x1xi1>
    %16 = arith.xori %12, %15 : vector<16x1xi1>
    %17 = arith.andi %16, %10 : vector<16x1xi1>
    %18 = vector.broadcast %6 : i32 to vector<16x1xi32>
    %19 = arith.addi %8, %18 : vector<16x1xi32>
    %20 = arith.select %17, %19, %8 : vector<16x1xi1>, vector<16x1xi32>
    %c0_i32_7 = arith.constant 0 : i32
    %21 = vector.broadcast %c0_i32_7 : i32 to vector<16x1xi32>
    %22 = arith.cmpi eq, %20, %21 : vector<16x1xi32>
    %23 = arith.extui %22 : vector<16x1xi1> to vector<16x1xi32>
    %24 = arith.sitofp %23 : vector<16x1xi32> to vector<16x1xf32>
    %cst_8 = arith.constant 1.000000e+00 : f32
    %25 = vector.broadcast %cst_8 : f32 to vector<16x1xf32>
    %26 = arith.addf %25, %24 : vector<16x1xf32>
    %c7_i32 = arith.constant 7 : i32
    %27 = vector.broadcast %c7_i32 : i32 to vector<16x1xi32>
    %28 = arith.cmpi eq, %20, %27 : vector<16x1xi32>
    %29 = arith.extui %28 : vector<16x1xi1> to vector<16x1xi32>
    %30 = arith.sitofp %29 : vector<16x1xi32> to vector<16x1xf32>
    %31 = arith.addf %26, %30 : vector<16x1xf32>
    %32 = vector.broadcast %31 : vector<16x1xf32> to vector<16x32xf32>
    %33 = arith.mulf %3, %32 : vector<16x32xf32>
    %cst_9 = arith.constant dense<0.000000e+00> : vector<32xf32>
    %34 = vector.multi_reduction <add>, %33, %cst_9 [0] : vector<16x32xf32> to vector<32xf32>
    %35 = vector.shape_cast %34 : vector<32xf32> to vector<1x32xf32>
    %36 = arith.mulf %3, %3 : vector<16x32xf32>
    %37 = vector.broadcast %31 : vector<16x1xf32> to vector<16x32xf32>
    %38 = arith.mulf %36, %37 : vector<16x32xf32>
    %cst_10 = arith.constant dense<0.000000e+00> : vector<32xf32>
    %39 = vector.multi_reduction <add>, %38, %cst_10 [0] : vector<16x32xf32> to vector<32xf32>
    %40 = vector.shape_cast %39 : vector<32xf32> to vector<1x32xf32>
    %cst_11 = arith.constant 5.000000e-02 : f32
    %41 = vector.broadcast %cst_11 : f32 to vector<1x32xf32>
    %42 = arith.mulf %35, %41 : vector<1x32xf32>
    %cst_12 = arith.constant 5.000000e-02 : f32
    %43 = vector.broadcast %cst_12 : f32 to vector<1x32xf32>
    %44 = arith.mulf %40, %43 : vector<1x32xf32>
    %45 = arith.mulf %42, %42 : vector<1x32xf32>
    %46 = arith.subf %44, %45 : vector<1x32xf32>
    %cst_13 = arith.constant 0.000000e+00 : f32
    %47 = vector.broadcast %cst_13 : f32 to vector<1x32xf32>
    %48 = arith.maximumf %46, %47 : vector<1x32xf32>
    %c0_14 = arith.constant 0 : index
    %c0_15 = arith.constant 0 : index
    %49 = vector.load %arg3[%c0_14, %c0_15] : memref<1x32xf32, #tpu.memory_space<vmem>>, vector<1x32xf32>
    %cst_16 = arith.constant 9.99999974E-6 : f32
    %50 = vector.broadcast %cst_16 : f32 to vector<1x32xf32>
    %51 = arith.addf %48, %50 : vector<1x32xf32>
    %52 = math.rsqrt %51 : vector<1x32xf32>
    %53 = arith.mulf %49, %52 : vector<1x32xf32>
    %c0_17 = arith.constant 0 : index
    %c0_18 = arith.constant 0 : index
    %54 = vector.load %arg4[%c0_17, %c0_18] : memref<1x32xf32, #tpu.memory_space<vmem>>, vector<1x32xf32>
    %55 = arith.mulf %42, %53 : vector<1x32xf32>
    %56 = arith.subf %54, %55 : vector<1x32xf32>
    %57 = vector.broadcast %53 : vector<1x32xf32> to vector<16x32xf32>
    %58 = arith.mulf %3, %57 : vector<16x32xf32>
    %59 = vector.broadcast %56 : vector<1x32xf32> to vector<16x32xf32>
    %60 = arith.addf %58, %59 : vector<16x32xf32>
    %61 = vector.shape_cast %60 : vector<16x32xf32> to vector<2x8x32xf32>
    %c0_19 = arith.constant 0 : index
    %c1 = arith.constant 1 : index
    %c0_20 = arith.constant 0 : index
    %62 = vector.load %arg5[%c0_19, %c1, %c0_20] : memref<2x10x32xf32, #tpu.memory_space<vmem>>, vector<2x8x32xf32>
    tpu.vector_store %arg5[%c0_19, %c1, %c0_20], %61 {strides = array<i32>} : memref<2x10x32xf32, #tpu.memory_space<vmem>>, vector<2x8x32xf32>,
    %63 = vector.extract_strided_slice %61 {offsets = [0, 7, 0], sizes = [2, 1, 32], strides = [1, 1, 1]} : vector<2x8x32xf32> to vector<2x1x32xf32>
    %c0_21 = arith.constant 0 : index
    %c0_22 = arith.constant 0 : index
    %c0_23 = arith.constant 0 : index
    %64 = vector.load %arg5[%c0_21, %c0_22, %c0_23] : memref<2x10x32xf32, #tpu.memory_space<vmem>>, vector<2x1x32xf32>
    tpu.vector_store %arg5[%c0_21, %c0_22, %c0_23], %63 {strides = array<i32>} : memref<2x10x32xf32, #tpu.memory_space<vmem>>, vector<2x1x32xf32>,
    %65 = vector.extract_strided_slice %61 {offsets = [0, 0, 0], sizes = [2, 1, 32], strides = [1, 1, 1]} : vector<2x8x32xf32> to vector<2x1x32xf32>
    %c0_24 = arith.constant 0 : index
    %c9 = arith.constant 9 : index
    %c0_25 = arith.constant 0 : index
    %66 = vector.load %arg5[%c0_24, %c9, %c0_25] : memref<2x10x32xf32, #tpu.memory_space<vmem>>, vector<2x1x32xf32>
    tpu.vector_store %arg5[%c0_24, %c9, %c0_25], %65 {strides = array<i32>} : memref<2x10x32xf32, #tpu.memory_space<vmem>>, vector<2x1x32xf32>,
    return
  }
  func.func @transform_0(%arg0: i32) -> (i32, i32, i32) {
    %c0_i32 = arith.constant 0 : i32
    %c0_i32_0 = arith.constant 0 : i32
    %c0_i32_1 = arith.constant 0 : i32
    %c0_i32_2 = arith.constant 0 : i32
    return %c0_i32, %c0_i32_0, %c0_i32_1 : i32, i32, i32
  }
  func.func @transform_1(%arg0: i32) -> (i32, i32) {
    %c0_i32 = arith.constant 0 : i32
    %c0_i32_0 = arith.constant 0 : i32
    %c0_i32_1 = arith.constant 0 : i32
    return %c0_i32, %c0_i32_0 : i32, i32
  }
  func.func @transform_2(%arg0: i32) -> (i32, i32) {
    %c0_i32 = arith.constant 0 : i32
    %c0_i32_0 = arith.constant 0 : i32
    %c0_i32_1 = arith.constant 0 : i32
    return %c0_i32, %c0_i32_0 : i32, i32
  }
  func.func @transform_3(%arg0: i32) -> (i32, i32) {
    %c0_i32 = arith.constant 0 : i32
    %c0_i32_0 = arith.constant 0 : i32
    %c0_i32_1 = arith.constant 0 : i32
    return %c0_i32, %c0_i32_0 : i32, i32
  }
  func.func @transform_4(%arg0: i32) -> (i32, i32, i32) {
    %c0_i32 = arith.constant 0 : i32
    %c0_i32_0 = arith.constant 0 : i32
    %c0_i32_1 = arith.constant 0 : i32
    %c0_i32_2 = arith.constant 0 : i32
    return %c0_i32, %c0_i32_0, %c0_i32_1 : i32, i32, i32
  }
}

</mosaic_0001>

<llo_original>
// kernel: embedding_encoder_conv.1
$region0: #{embedding_encoder_conv.1}
  #allocation0 [shape = 'u32[]', space=smem, size = 0x4, offset = 0x4, fixed_abs, tag = 'smem constant byte address 0x4 - core index']
  #allocation1 [shape = 'u32[72,128]{1,0:T(1,128)}', space=vmem, size = 0x9000, scoped, tag = 'internal scratch']
  %s0 = inlined_call_operand.hbm [shape: f32[2,8,32], index: 0, kind: input, shape index: {}]
  %s1 = inlined_call_operand.hbm [shape: f32[32,32], index: 1, kind: input, shape index: {}]
  %s2 = inlined_call_operand.vmem [shape: f32[1,32], index: 2, kind: input, shape index: {}]
  %s3 = inlined_call_operand.vmem [shape: f32[1,32], index: 3, kind: input, shape index: {}]
  %s4 = inlined_call_operand.vmem [shape: f32[2,10,32], index: 4, kind: output, shape index: {}]
  %s5 = sld [smem:[#allocation0]]
  $region34: #{embedding_encoder_conv.1} parent=0
    _
  %s7 = ssub.s32 1, %s5
  %s8 = scalar_select 0, %s7, %s5
  $region1: #{embedding_encoder_conv.1} parent=0
    #allocation2 [shape = 'u8[8192]{0}', space=vmem, size = 0x2000, scoped, tag = 'input window, operand 0, single buffered']
    #allocation3 [shape = 's32[1]{0}', space=sflag, size = 0x4, scoped, tag = 'scoped memory for embedding_encoder_conv.1']
    #allocation4 [shape = 'u8[16384]{0}', space=vmem, size = 0x4000, scoped, tag = 'input window, operand 1, single buffered']
    #allocation5 [shape = 's32[1]{0}', space=sflag, size = 0x4, scoped, tag = 'scoped memory for embedding_encoder_conv.1']
    %9 = vsyncpa [#allocation3], 0
    %10 = vsyncpa [#allocation5], 0
    // Predicated region
    $region2: #{embedding_encoder_conv.1} parent=1 // pred_check
      _
    $region3: #{embedding_encoder_conv.1} parent=1 // pred_check_branch
      %12 = sbr.rel (0) target = $region5
    $region4: #{embedding_encoder_conv.1} parent=1 // pred_region
      %14 = vsyncadd [#allocation3], 0
      %s15 = sshll.u32 %s0, 4
      %s16 = int_to_ptr.hbm [resolvable:$true] %s15
      %s17 = sshll.u32 [#allocation2], 4
      %s18 = int_to_ptr.vmem [resolvable:$true] %s17
      %23 = dma.hbm_to_vmem [thread:$0]  %s16, 256, %s18, [#allocation3], 128, 128, 8
    $region5: #{embedding_encoder_conv.1} parent=1 // pred_fallthru
      _
    // Predicated region
    $region6: #{embedding_encoder_conv.1} parent=1 // pred_check
      _
    $region7: #{embedding_encoder_conv.1} parent=1 // pred_check_branch
      %25 = sbr.rel (0) target = $region9
    $region8: #{embedding_encoder_conv.1} parent=1 // pred_region
      %27 = vsyncadd [#allocation5], 0
      %s28 = sshll.u32 %s1, 4
      %s29 = int_to_ptr.hbm [resolvable:$true] %s28
      %s30 = sshll.u32 [#allocation4], 4
      %s31 = int_to_ptr.vmem [resolvable:$true] %s30
      %36 = dma.hbm_to_vmem [thread:$0]  %s29, 512, %s31, [#allocation5], 128, 128, 8
    $region9: #{embedding_encoder_conv.1} parent=1 // pred_fallthru
      _
    // Predicated region
    $region10: #{embedding_encoder_conv.1} parent=1 // pred_check
      _
    $region11: #{embedding_encoder_conv.1} parent=1 // pred_check_branch
      %38 = sbr.rel (0) target = $region13
    $region12: #{embedding_encoder_conv.1} parent=1 // pred_region
      _
    $region13: #{embedding_encoder_conv.1} parent=1 // pred_fallthru
      _
    // Predicated region
    $region14: #{embedding_encoder_conv.1} parent=1 // pred_check
      _
    $region15: #{embedding_encoder_conv.1} parent=1 // pred_check_branch
      %40 = sbr.rel (0) target = $region17
    $region16: #{embedding_encoder_conv.1} parent=1 // pred_region
      _
    $region17: #{embedding_encoder_conv.1} parent=1 // pred_fallthru
      _
    // Predicated region
    $region18: #{embedding_encoder_conv.1} parent=1 // pred_check
      _
    $region19: #{embedding_encoder_conv.1} parent=1 // pred_check_branch
      %42 = sbr.rel (0) target = $region21
    $region20: #{embedding_encoder_conv.1} parent=1 // pred_region
      %44 = dma.done [#allocation3], 256
    $region21: #{embedding_encoder_conv.1} parent=1 // pred_fallthru
      _
    // Predicated region
    $region22: #{embedding_encoder_conv.1} parent=1 // pred_check
      _
    $region23: #{embedding_encoder_conv.1} parent=1 // pred_check_branch
      %46 = sbr.rel (0) target = $region25
    $region24: #{embedding_encoder_conv.1} parent=1 // pred_region
      %48 = dma.done [#allocation5], 512
    $region25: #{embedding_encoder_conv.1} parent=1 // pred_fallthru
      _
    %v49 = vld [vmem:[#allocation2] sm:$0xff]
    %v50 = vld [vmem:[#allocation2 + $0x8] sm:$0xff]
    %v51 = vld [vmem:[#allocation4] sm:$0xff]
    %v52 = vld [vmem:[#allocation4 + $0x8] sm:$0xff]
    %v53 = vld [vmem:[#allocation4 + $0x10] sm:$0xff]
    %v54 = vld [vmem:[#allocation4 + $0x18] sm:$0xff]
    %vm55 = vcmask 261120
    %v57 = vsel %vm55, %v49, 0
    %v60 = vsel %vm55, %v50, 0
    %62 = vmatpush.msra.mxu0 0.0
    %63 = vmatpush.msra.mxu0 0.0
    %64 = vmatpush.msra.mxu0 0.0
    %65 = vmatpush.msra.mxu0 0.0
    %66 = vmatpush.msra.mxu0 0.0
    %67 = vmatpush.msra.mxu0 0.0
    %68 = vmatpush.msra.mxu0 0.0
    %69 = vmatpush.msra.mxu0 0.0
    %70 = vmatpush.msra.mxu0 0.0
    %71 = vmatpush.msra.mxu0 0.0
    %72 = vmatpush.msra.mxu0 0.0
    %73 = vmatpush.msra.mxu0 0.0
    %74 = vmatpush.msra.mxu0 %v54
    %75 = vmatpush.msra.mxu0 %v53
    %76 = vmatpush.msra.mxu0 %v52
    %77 = vmatpush.msra.mxu0 %v51
    %78 = vmatmul.f32.gmra.mxu0 %v57
    %v79 = vpop.f32.mrf.mxu0
    %v80 = vadd.f32 0.0, %v79
    %81 = vmatmul.f32.gmra.mxu0 %v60
    %v82 = vpop.f32.mrf.mxu0
    %v83 = vadd.f32 0.0, %v82
    %84 = vdwg.mxu0
    %v85 = vlaneseq
    %v86 = vshrl.u32 %v85, 7
    %v87 = vadd.s32 %v86, 8
    %vm88 = vcmp.lt.s32.totalorder %v86, 0
    %v89 = vsub.s32 0, %v86
    %v90 = vsel %vm88, %v89, %v86
    %v91 = vshrl.u32 %v90, 3
    %v92 = vand.u32 %v90, 7
    %v93 = vsub.s32 0, %v92
    %v94 = vsel %vm88, %v93, %v92
    %vm95 = vcmp.lt.s32.totalorder %v87, 0
    %v96 = vsub.s32 0, %v87
    %v97 = vsel %vm95, %v96, %v87
    %v98 = vshrl.u32 %v97, 3
    %v99 = vand.u32 %v97, 7
    %v100 = vsub.s32 0, %v99
    %v101 = vsel %vm95, %v100, %v99
    %vm102 = vcmp.ne.s32.totalorder %v94, 0
    %vm103 = vcmp.ne.s32.totalorder %v101, 0
    %vm104 = vcmp.lt.s32.totalorder %v94, 0
    %vm105 = vcmp.lt.s32.totalorder %v101, 0
    %vm106 = vmand %vm104, %vm102
    %vm107 = vmand %vm105, %vm103
    %v108 = vadd.s32 %v94, 8
    %v109 = vadd.s32 %v101, 8
    %v110 = vsel %vm106, %v108, %v94
    %v111 = vsel %vm107, %v109, %v101
    %vm112 = vcmp.eq.s32.totalorder %v110, 0
    %vm113 = vcmp.eq.s32.totalorder %v111, 0
    %v114 = vsel %vm112, 1, 0
    %v115 = vsel %vm113, 1, 0
    %v116 = vcvt.s32.f32 %v114
    %v117 = vcvt.s32.f32 %v115
    %v118 = vadd.f32 %v116, 1.0
    %v119 = vadd.f32 %v117, 1.0
    %vm120 = vcmp.eq.s32.totalorder %v110, 7
    %vm121 = vcmp.eq.s32.totalorder %v111, 7
    %v122 = vsel %vm120, 1, 0
    %v123 = vsel %vm121, 1, 0
    %v124 = vcvt.s32.f32 %v122
    %v125 = vcvt.s32.f32 %v123
    %v126 = vadd.f32 %v118, %v124
    %v127 = vadd.f32 %v119, %v125
    %v128 = vmul.f32 %v80, %v126
    %v129 = vmul.f32 %v83, %v127
    %v130 = vsel %vm55, %v128, 0.0
    %v131 = vsel %vm55, %v129, 0.0
    %v132 = vadd.f32 %v130, %v131
    %v133 = vrot.slane %v132, 4
    %v134 = vadd.f32 %v132, %v133
    %v135 = vrot.slane %v134, 2
    %v136 = vadd.f32 %v134, %v135
    %v137 = vrot.slane %v136, 1
    %v138 = vadd.f32 %v136, %v137
    %v139 = vmul.f32 %v80, %v80
    %v140 = vmul.f32 %v83, %v83
    %v141 = vmul.f32 %v139, %v126
    %v142 = vmul.f32 %v140, %v127
    %v143 = vsel %vm55, %v141, 0.0
    %v144 = vsel %vm55, %v142, 0.0
    %v145 = vadd.f32 %v143, %v144
    %v146 = vrot.slane %v145, 4
    %v147 = vadd.f32 %v145, %v146
    %v148 = vrot.slane %v147, 2
    %v149 = vadd.f32 %v147, %v148
    %v150 = vrot.slane %v149, 1
    %v151 = vadd.f32 %v149, %v150
    %v152 = vmul.f32 %v138, 0.05
    %v153 = vmul.f32 %v151, 0.05
    %v154 = vmul.f32 %v152, %v152
    %v155 = vsub.f32 %v153, %v154
    %v156 = vmax.f32 %v155, 0.0
    %v157 = vld [vmem:[%s2] sm:$0x1]
    %v158 = vadd.f32 %v156, 1e-05
    %v159 = vrsqrt.pop %v158
    %v160 = vmul.f32 %v159, %v158
    %v161 = vmul.f32 %v160, %v159
    %v162 = vmul.f32 0.5, %v161
    %v163 = vsub.f32 1.5, %v162
    %v164 = vmul.f32 %v159, %v163
    %vm165 = vweird.f32 %v158
    %vm166 = vweird.f32 %v159
    %vm167 = vmor %vm165, %vm166
    %v168 = vsel %vm167, %v159, %v164
    %v169 = vmul.f32 %v157, %v168
    %v170 = vld [vmem:[%s3] sm:$0x1]
    %v171 = vmul.f32 %v152, %v169
    %v172 = vsub.f32 %v170, %v171
    %v174 = vperm.slane %v169, 0
    %v176 = vmul.f32 %v80, %v174
    %v177 = vmul.f32 %v83, %v174
    %v179 = vperm.slane %v172, 0
    %v181 = vadd.f32 %v176, %v179
    %v182 = vadd.f32 %v177, %v179
    %183 = vst.msk [vmem:[%s4 + $0x1] sm:$0xff] %vm55, %v181
    %184 = vst.msk [vmem:[%s4 + $0x11] sm:$0xff] %vm55, %v182
    %vm185 = vcmask 261127
    %186 = vst.msk [vmem:[%s4 - $0x7] sm:$0x80] %vm185, %v181
    %187 = vst.msk [vmem:[%s4 + $0x9] sm:$0x80] %vm185, %v182
    %vm188 = vcmask 253952
    %189 = vst.msk [vmem:[%s4 + $0x9] sm:$0x1] %vm188, %v181
    %190 = vst.msk [vmem:[%s4 + $0x19] sm:$0x1] %vm188, %v182
    // Predicated region
    $region26: #{embedding_encoder_conv.1} parent=1 // pred_check
      _
    $region27: #{embedding_encoder_conv.1} parent=1 // pred_check_branch
      %192 = sbr.rel (0) target = $region29
    $region28: #{embedding_encoder_conv.1} parent=1 // pred_region
      _
    $region29: #{embedding_encoder_conv.1} parent=1 // pred_fallthru
      _
    // Predicated region
    $region30: #{embedding_encoder_conv.1} parent=1 // pred_check
      _
    $region31: #{embedding_encoder_conv.1} parent=1 // pred_check_branch
      %194 = sbr.rel (0) target = $region33
    $region32: #{embedding_encoder_conv.1} parent=1 // pred_region
      _
    $region33: #{embedding_encoder_conv.1} parent=1 // pred_fallthru
      _
    %195 = vsyncpa [#allocation3], 1
    %196 = vsyncpa [#allocation5], 1

</llo_original>
